<compile_context>
chip_gen: v5e
topology: v5e:2x2
jax: 0.10.0
libtpu: 0.0.40
codegen_flags: <defaults>
</compile_context>

<pallas_src>
import functools

import jax
import jax.numpy as jnp
from jax import lax
from jax.experimental import pallas as pl
from jax.experimental.pallas import tpu as pltpu


def _quantum_dense_kernel(x_ref, w_ref, o_ref, *, last_layer):
    # x_ref: (tb, dim_in)      current batch tile of the input states
    # w_ref: (dim_out, dim_in) raw (un-normalized) random eigenvector matrix
    # o_ref: (tb, dim_out)     output tile
    w = w_ref[...].astype(jnp.float32)
    # Row-normalize the eigenvector matrix: eig_vec / ||eig_vec||_row.
    w_ss = jnp.sum(w * w, axis=1, keepdims=True)              # (dim_out, 1)
    w_n = w * lax.rsqrt(w_ss)                                  # EUP rsqrt + VPU

    x = x_ref[...].astype(jnp.float32)                         # (tb, dim_in)
    # psy_out = einsum('ij,bj->bi', eig_veg, x)  ->  x @ eig_veg.T on the MXU.
    y = lax.dot_general(
        x, w_n,
        dimension_numbers=(((1,), (1,)), ((), ())),
        preferred_element_type=jnp.float32,
        precision=lax.Precision.HIGHEST,
    )                                                          # (tb, dim_out)

    # Per-sample L2 normalization of the output state.
    y_ss = jnp.sum(y * y, axis=1, keepdims=True)               # (tb, 1)
    y_n = y * lax.rsqrt(y_ss)
    out = y_n * y_n if last_layer else y_n                     # probabilities
    o_ref[...] = out.astype(o_ref.dtype)


def quantum_dense_forward(inputs, eig_vec, *, last_layer=True, tb=512):
    """Pallas implementation of QuantumDenseLayer.forward.

    inputs:  (B, dim_in)
    eig_vec: (dim_out, dim_in) raw normal random matrix (re-drawn per call by
             the caller, matching the torch module).
    returns: (B, dim_out)
    """
    B, dim_in = inputs.shape
    dim_out, dim_in2 = eig_vec.shape
    assert dim_in == dim_in2, "eig_vec inner dim must match inputs"
    out_dtype = jnp.result_type(inputs.dtype, eig_vec.dtype)

    # --- batch tile selection -------------------------------------------------
    # Decouple VMEM from B; keep (double-buffered blocks + compute temporaries)
    # comfortably under the scoped-VMEM budget on all generations.
    tb = min(tb, B)

    def _footprint_bytes(t):  # one buffer set, f32
        return 4 * (t * dim_in + dim_out * dim_in + t * dim_out)

    while tb > 8 and 3 * _footprint_bytes(tb) > (24 << 20):
        tb = max(8, tb // 2)
    if tb != B and tb % 8 != 0:
        # second-to-last block dim must be a multiple of 8 unless it equals the
        # full array dimension.
        tb = max(8, (tb // 8) * 8)

    grid = (pl.cdiv(B, tb),)
    kernel = functools.partial(_quantum_dense_kernel, last_layer=last_layer)

    return pl.pallas_call(
        kernel,
        out_shape=jax.ShapeDtypeStruct((B, dim_out), out_dtype),
        grid_spec=pltpu.PrefetchScalarGridSpec(
            num_scalar_prefetch=0,
            grid=grid,
            in_specs=[
                # Batch tile of the inputs.
                pl.BlockSpec((tb, dim_in), lambda b: (b, 0)),
                # Full weight matrix; constant block index -> fetched once and
                # kept resident in VMEM across all batch tiles.
                pl.BlockSpec((dim_out, dim_in), lambda b: (0, 0)),
            ],
            out_specs=pl.BlockSpec((tb, dim_out), lambda b: (b, 0)),
        ),
        compiler_params=pltpu.CompilerParams(
            dimension_semantics=("parallel",),
            vmem_limit_bytes=32 * 1024 * 1024,
        ),
    )(inputs, eig_vec)


def quantum_dense_layer(inputs, dim_out, key, *, last_layer=True):
    """Mirrors the torch module: draws a fresh normal eig_vec on every call."""
    # TODO(synk): torch.nn.init.normal_ is re-drawn inside forward; we mirror
    # that with jax.random in the wrapper (RNG stream differs from torch).
    dim_in = inputs.shape[-1]
    eig_vec = jax.random.normal(key, (dim_out, dim_in), dtype=inputs.dtype)
    return quantum_dense_forward(inputs, eig_vec, last_layer=last_layer)


def _reference(inputs, eig_vec, last_layer=True):
    """Pure-JAX transliteration of the torch forward (same eig_vec)."""
    norms = jnp.linalg.norm(eig_vec, axis=1, keepdims=True)
    w_n = eig_vec / norms
    psy = jnp.einsum('ij,...j->...i', w_n, inputs,
                     precision=jax.lax.Precision.HIGHEST)
    psy = psy / jnp.linalg.norm(psy, axis=1, keepdims=True)
    return jnp.square(psy) if last_layer else psy


if __name__ == "__main__":
    key = jax.random.PRNGKey(0)
    k_x, k_w = jax.random.split(key)

    B, dim_in, dim_out = 8, 32, 16
    x = jax.random.normal(k_x, (B, dim_in), dtype=jnp.float32)
    # Fresh random eigenvector matrix (as the torch forward does every call);
    # generated here so the kernel and the reference see the same weights.
    eig_vec = jax.random.normal(k_w, (dim_out, dim_in), dtype=jnp.float32)

    out = quantum_dense_forward(x, eig_vec, last_layer=True)
    out = jax.block_until_ready(out)

    ref = _reference(x, eig_vec, last_layer=True)
    assert out.shape == (B, dim_out), out.shape
    assert jnp.allclose(out, ref, atol=1e-5, rtol=1e-4), \
        float(jnp.max(jnp.abs(out - ref)))
    # last_layer=True returns squared amplitudes of a unit vector -> sums to 1.
    assert jnp.allclose(out.sum(axis=1), 1.0, atol=1e-5)

    # Also exercise the not-last-layer branch.
    psy = jax.block_until_ready(
        quantum_dense_forward(x, eig_vec, last_layer=False))
    assert jnp.allclose(psy, _reference(x, eig_vec, last_layer=False),
                        atol=1e-5, rtol=1e-4)

    print("KERNEL_OK")
</pallas_src>

<mosaic_0001>
module attributes {stable_mosaic.version = 11 : i64} {
  func.func @_quantum_dense_kernel(%arg0: i32, %arg1: memref<8x32xf32, #tpu.memory_space<vmem>>, %arg2: memref<16x32xf32, #tpu.memory_space<vmem>>, %arg3: memref<8x16xf32, #tpu.memory_space<vmem>>) attributes {dimension_semantics = [#tpu.dimension_semantics<parallel>], iteration_bounds = array<i64: 1>, scalar_prefetch = 0 : i64, scratch_operands = 0 : i64, tpu.core_type = #tpu.core_type<tc>, window_params = [{transform_indices = @transform_0, window_bounds = array<i64: 8, 32>}, {pipeline_mode = #tpu.pipeline_mode<synchronous>, transform_indices = @transform_1, window_bounds = array<i64: 16, 32>}, {transform_indices = @transform_2, window_bounds = array<i64: 8, 16>}]} {
    %c0 = arith.constant 0 : index
    %c0_0 = arith.constant 0 : index
    %0 = vector.load %arg2[%c0, %c0_0] : memref<16x32xf32, #tpu.memory_space<vmem>>, vector<16x32xf32>
    %1 = arith.mulf %0, %0 : vector<16x32xf32>
    %cst = arith.constant dense<0.000000e+00> : vector<16xf32>
    %2 = vector.multi_reduction <add>, %1, %cst [1] : vector<16x32xf32> to vector<16xf32>
    %3 = vector.shape_cast %2 : vector<16xf32> to vector<16x1xf32>
    %4 = math.rsqrt %3 : vector<16x1xf32>
    %5 = vector.broadcast %4 : vector<16x1xf32> to vector<16x32xf32>
    %6 = arith.mulf %0, %5 : vector<16x32xf32>
    %c0_1 = arith.constant 0 : index
    %c0_2 = arith.constant 0 : index
    %7 = vector.load %arg1[%c0_1, %c0_2] : memref<8x32xf32, #tpu.memory_space<vmem>>, vector<8x32xf32>
    %cst_3 = arith.constant dense<0.000000e+00> : vector<8x16xf32>
    %8 = tpu.matmul %7, %6, %cst_3 {dimension_numbers = #tpu.dot_dimension_numbers<[1], [1], [0], [0], [0, 0, 1, 0], [], []>, precision = #tpu.contract_precision<fp32>} : vector<8x32xf32>, vector<16x32xf32>, vector<8x16xf32> -> vector<8x16xf32>
    %9 = arith.mulf %8, %8 : vector<8x16xf32>
    %cst_4 = arith.constant dense<0.000000e+00> : vector<8xf32>
    %10 = vector.multi_reduction <add>, %9, %cst_4 [1] : vector<8x16xf32> to vector<8xf32>
    %11 = vector.shape_cast %10 : vector<8xf32> to vector<8x1xf32>
    %12 = math.rsqrt %11 : vector<8x1xf32>
    %13 = vector.broadcast %12 : vector<8x1xf32> to vector<8x16xf32>
    %14 = arith.mulf %8, %13 : vector<8x16xf32>
    %15 = arith.mulf %14, %14 : vector<8x16xf32>
    %c0_5 = arith.constant 0 : index
    %c0_6 = arith.constant 0 : index
    %16 = vector.load %arg3[%c0_5, %c0_6] : memref<8x16xf32, #tpu.memory_space<vmem>>, vector<8x16xf32>
    tpu.vector_store %arg3[%c0_5, %c0_6], %15 {strides = array<i32>} : memref<8x16xf32, #tpu.memory_space<vmem>>, vector<8x16xf32>,
    return
  }
  func.func @transform_0(%arg0: i32) -> (i32, i32) {
    %c0_i32 = arith.constant 0 : i32
    %c0_i32_0 = arith.constant 0 : i32
    return %arg0, %c0_i32 : i32, i32
  }
  func.func @transform_1(%arg0: i32) -> (i32, i32) {
    %c0_i32 = arith.constant 0 : i32
    %c0_i32_0 = arith.constant 0 : i32
    %c0_i32_1 = arith.constant 0 : i32
    return %c0_i32, %c0_i32_0 : i32, i32
  }
  func.func @transform_2(%arg0: i32) -> (i32, i32) {
    %c0_i32 = arith.constant 0 : i32
    %c0_i32_0 = arith.constant 0 : i32
    return %arg0, %c0_i32 : i32, i32
  }
}

</mosaic_0001>

<llo_original>
// kernel: tpu_custom_call.1
$region0: #{tpu_custom_call.1}
  #allocation0 [shape = 'u32[]', space=smem, size = 0x4, offset = 0x4, fixed_abs, tag = 'smem constant byte address 0x4 - core index']
  #allocation1 [shape = 'u32[72,128]{1,0:T(1,128)}', space=vmem, size = 0x9000, scoped, tag = 'internal scratch']
  %s0 = inlined_call_operand.hbm [shape: f32[8,32], index: 0, kind: input, shape index: {}]
  %s1 = inlined_call_operand.hbm [shape: f32[16,32], index: 1, kind: input, shape index: {}]
  %s2 = inlined_call_operand.hbm [shape: f32[8,16], index: 2, kind: output, shape index: {}]
  %s3 = sld [smem:[#allocation0]]
  $region26: #{tpu_custom_call.1} parent=0
    _
  %s5 = ssub.s32 1, %s3
  %s6 = scalar_select 0, %s5, %s3
  $region1: #{tpu_custom_call.1} parent=0
    #allocation2 [shape = 'u8[4096]{0}', space=vmem, size = 0x1000, scoped, tag = 'input window, operand 0, single buffered']
    #allocation3 [shape = 's32[1]{0}', space=sflag, size = 0x4, scoped, tag = 'scoped memory for tpu_custom_call.1']
    #allocation4 [shape = 's32[1]{0}', space=sflag, size = 0x4, scoped, tag = 'scoped memory for tpu_custom_call.1']
    #allocation5 [shape = 'u8[8192]{0}', space=vmem, size = 0x2000, scoped, tag = 'input window, operand 1, single buffered']
    #allocation6 [shape = 's32[1]{0}', space=sflag, size = 0x4, scoped, tag = 'scoped memory for tpu_custom_call.1']
    #allocation7 [shape = 'u8[4096]{0}', space=vmem, size = 0x1000, scoped, tag = 'output window, operand 0, single buffered']
    %7 = vsyncpa [#allocation3], 0
    %8 = vsyncpa [#allocation6], 0
    %9 = vsyncpa [#allocation4], 0
    // Predicated region
    $region2: #{tpu_custom_call.1} parent=1 // pred_check
      _
    $region3: #{tpu_custom_call.1} parent=1 // pred_check_branch
      %11 = sbr.rel (0) target = $region5
    $region4: #{tpu_custom_call.1} parent=1 // pred_region
      %13 = vsyncadd [#allocation3], 0
      %s15 = sshll.u32 %s0, 4
      %s16 = int_to_ptr.hbm [resolvable:$true] %s15
      %s17 = sshll.u32 [#allocation2], 4
      %s18 = int_to_ptr.vmem [resolvable:$true] %s17
      %20 = dma.hbm_to_vmem [thread:$0]  %s16, 128, %s18, [#allocation3]
    $region5: #{tpu_custom_call.1} parent=1 // pred_fallthru
      _
    // Predicated region
    $region6: #{tpu_custom_call.1} parent=1 // pred_check
      _
    $region7: #{tpu_custom_call.1} parent=1 // pred_check_branch
      %22 = sbr.rel (0) target = $region9
    $region8: #{tpu_custom_call.1} parent=1 // pred_region
      %24 = vsyncadd [#allocation6], 0
      %s25 = sshll.u32 %s1, 4
      %s26 = int_to_ptr.hbm [resolvable:$true] %s25
      %s27 = sshll.u32 [#allocation5], 4
      %s28 = int_to_ptr.vmem [resolvable:$true] %s27
      %33 = dma.hbm_to_vmem [thread:$0]  %s26, 256, %s28, [#allocation6], 128, 128, 8
    $region9: #{tpu_custom_call.1} parent=1 // pred_fallthru
      _
    // Predicated region
    $region10: #{tpu_custom_call.1} parent=1 // pred_check
      _
    $region11: #{tpu_custom_call.1} parent=1 // pred_check_branch
      %35 = sbr.rel (0) target = $region13
    $region12: #{tpu_custom_call.1} parent=1 // pred_region
      %37 = dma.done [#allocation3], 128
    $region13: #{tpu_custom_call.1} parent=1 // pred_fallthru
      _
    // Predicated region
    $region14: #{tpu_custom_call.1} parent=1 // pred_check
      _
    $region15: #{tpu_custom_call.1} parent=1 // pred_check_branch
      %39 = sbr.rel (0) target = $region17
    $region16: #{tpu_custom_call.1} parent=1 // pred_region
      %41 = dma.done [#allocation6], 256
    $region17: #{tpu_custom_call.1} parent=1 // pred_fallthru
      _
    %v42 = vld [vmem:[#allocation5] sm:$0xff]
    %v43 = vld [vmem:[#allocation5 + $0x8] sm:$0xff]
    %v44 = vmul.f32 %v42, %v42
    %v45 = vmul.f32 %v43, %v43
    %vm46 = vcmask 261120
    %v47 = vsel %vm46, %v44, 0.0
    %48 = vadd.xlane.f32.xlu0 %v47
    %v49 = vpop.xlane.xlu0 %48
    %v50 = vsel %vm46, %v45, 0.0
    %51 = vadd.xlane.f32.xlu0 %v50
    %v52 = vpop.xlane.xlu0 %51
    %v53 = vrsqrt.pop %v49
    %v54 = vmul.f32 %v53, %v49
    %v55 = vmul.f32 %v54, %v53
    %v56 = vmul.f32 0.5, %v55
    %v57 = vsub.f32 1.5, %v56
    %v58 = vmul.f32 %v53, %v57
    %vm59 = vweird.f32 %v49
    %vm60 = vweird.f32 %v53
    %vm61 = vmor %vm59, %vm60
    %v62 = vsel %vm61, %v53, %v58
    %v63 = vrsqrt.pop %v52
    %v64 = vmul.f32 %v63, %v52
    %v65 = vmul.f32 %v64, %v63
    %v66 = vmul.f32 0.5, %v65
    %v67 = vsub.f32 1.5, %v66
    %v68 = vmul.f32 %v63, %v67
    %vm69 = vweird.f32 %v52
    %vm70 = vweird.f32 %v63
    %vm71 = vmor %vm69, %vm70
    %v72 = vsel %vm71, %v63, %v68
    %v73 = vmul.f32 %v42, %v62
    %v74 = vmul.f32 %v43, %v72
    %v75 = vld [vmem:[#allocation2] sm:$0xff]
    %v77 = vsel %vm46, %v75, 0
    %v80 = vsel %vm46, %v73, 0
    %v83 = vsel %vm46, %v74, 0
    %85 = vmatpush.xpose.msra.mxu0 0.0
    %86 = vmatpush.xpose.msra.mxu0 0.0
    %87 = vmatpush.xpose.msra.mxu0 0.0
    %88 = vmatpush.xpose.msra.mxu0 0.0
    %89 = vmatpush.xpose.msra.mxu0 0.0
    %90 = vmatpush.xpose.msra.mxu0 0.0
    %91 = vmatpush.xpose.msra.mxu0 0.0
    %92 = vmatpush.xpose.msra.mxu0 0.0
    %93 = vmatpush.xpose.msra.mxu0 0.0
    %94 = vmatpush.xpose.msra.mxu0 0.0
    %95 = vmatpush.xpose.msra.mxu0 0.0
    %96 = vmatpush.xpose.msra.mxu0 0.0
    %97 = vmatpush.xpose.msra.mxu0 0.0
    %98 = vmatpush.xpose.msra.mxu0 0.0
    %v99 = vand.u32 %v83, 4294901760
    %100 = vmatpush.xpose.msra.mxu0 %v99
    %v101 = vand.u32 %v80, 4294901760
    %102 = vmatpush.xpose.msra.mxu0 %v101
    %v103 = vand.u32 %v77, 4294901760
    %v104 = vsub.f32 %v77, %v103
    %v105 = vand.u32 %v104, 4294901760
    %v106 = vsub.f32 %v104, %v105
    %v107 = vand.u32 %v106, 4294901760
    %108 = vmatmul.f32.gmra.mxu0 %v107
    %v109 = vpop.f32.mrf.mxu0
    %v110 = vadd.f32 0.0, %v109
    %111 = vdwg.mxu0
    %112 = vmatpush.xpose.msra.mxu0 0.0
    %113 = vmatpush.xpose.msra.mxu0 0.0
    %114 = vmatpush.xpose.msra.mxu0 0.0
    %115 = vmatpush.xpose.msra.mxu0 0.0
    %116 = vmatpush.xpose.msra.mxu0 0.0
    %117 = vmatpush.xpose.msra.mxu0 0.0
    %118 = vmatpush.xpose.msra.mxu0 0.0
    %119 = vmatpush.xpose.msra.mxu0 0.0
    %120 = vmatpush.xpose.msra.mxu0 0.0
    %121 = vmatpush.xpose.msra.mxu0 0.0
    %122 = vmatpush.xpose.msra.mxu0 0.0
    %123 = vmatpush.xpose.msra.mxu0 0.0
    %124 = vmatpush.xpose.msra.mxu0 0.0
    %125 = vmatpush.xpose.msra.mxu0 0.0
    %v126 = vand.u32 %v83, 4294901760
    %v127 = vsub.f32 %v83, %v126
    %v128 = vand.u32 %v127, 4294901760
    %v129 = vsub.f32 %v127, %v128
    %v130 = vand.u32 %v129, 4294901760
    %131 = vmatpush.xpose.msra.mxu0 %v130
    %v132 = vand.u32 %v80, 4294901760
    %v133 = vsub.f32 %v80, %v132
    %v134 = vand.u32 %v133, 4294901760
    %v135 = vsub.f32 %v133, %v134
    %v136 = vand.u32 %v135, 4294901760
    %137 = vmatpush.xpose.msra.mxu0 %v136
    %v138 = vand.u32 %v77, 4294901760
    %139 = vmatmul.f32.gmra.mxu0 %v138
    %v140 = vpop.f32.mrf.mxu0
    %v141 = vadd.f32 %v110, %v140
    %142 = vdwg.mxu0
    %143 = vmatpush.xpose.msra.mxu0 0.0
    %144 = vmatpush.xpose.msra.mxu0 0.0
    %145 = vmatpush.xpose.msra.mxu0 0.0
    %146 = vmatpush.xpose.msra.mxu0 0.0
    %147 = vmatpush.xpose.msra.mxu0 0.0
    %148 = vmatpush.xpose.msra.mxu0 0.0
    %149 = vmatpush.xpose.msra.mxu0 0.0
    %150 = vmatpush.xpose.msra.mxu0 0.0
    %151 = vmatpush.xpose.msra.mxu0 0.0
    %152 = vmatpush.xpose.msra.mxu0 0.0
    %153 = vmatpush.xpose.msra.mxu0 0.0
    %154 = vmatpush.xpose.msra.mxu0 0.0
    %155 = vmatpush.xpose.msra.mxu0 0.0
    %156 = vmatpush.xpose.msra.mxu0 0.0
    %v157 = vand.u32 %v83, 4294901760
    %v158 = vsub.f32 %v83, %v157
    %159 = vmatpush.xpose.msra.mxu0 %v158
    %v160 = vand.u32 %v80, 4294901760
    %v161 = vsub.f32 %v80, %v160
    %162 = vmatpush.xpose.msra.mxu0 %v161
    %v163 = vand.u32 %v77, 4294901760
    %v164 = vsub.f32 %v77, %v163
    %165 = vmatmul.f32.gmra.mxu0 %v164
    %v166 = vpop.f32.mrf.mxu0
    %v167 = vadd.f32 %v141, %v166
    %168 = vdwg.mxu0
    %169 = vmatpush.xpose.msra.mxu0 0.0
    %170 = vmatpush.xpose.msra.mxu0 0.0
    %171 = vmatpush.xpose.msra.mxu0 0.0
    %172 = vmatpush.xpose.msra.mxu0 0.0
    %173 = vmatpush.xpose.msra.mxu0 0.0
    %174 = vmatpush.xpose.msra.mxu0 0.0
    %175 = vmatpush.xpose.msra.mxu0 0.0
    %176 = vmatpush.xpose.msra.mxu0 0.0
    %177 = vmatpush.xpose.msra.mxu0 0.0
    %178 = vmatpush.xpose.msra.mxu0 0.0
    %179 = vmatpush.xpose.msra.mxu0 0.0
    %180 = vmatpush.xpose.msra.mxu0 0.0
    %181 = vmatpush.xpose.msra.mxu0 0.0
    %182 = vmatpush.xpose.msra.mxu0 0.0
    %v183 = vand.u32 %v83, 4294901760
    %184 = vmatpush.xpose.msra.mxu0 %v183
    %v185 = vand.u32 %v80, 4294901760
    %186 = vmatpush.xpose.msra.mxu0 %v185
    %v187 = vand.u32 %v77, 4294901760
    %v188 = vsub.f32 %v77, %v187
    %v189 = vand.u32 %v188, 4294901760
    %190 = vmatmul.f32.gmra.mxu0 %v189
    %v191 = vpop.f32.mrf.mxu0
    %v192 = vadd.f32 %v167, %v191
    %193 = vdwg.mxu0
    %194 = vmatpush.xpose.msra.mxu0 0.0
    %195 = vmatpush.xpose.msra.mxu0 0.0
    %196 = vmatpush.xpose.msra.mxu0 0.0
    %197 = vmatpush.xpose.msra.mxu0 0.0
    %198 = vmatpush.xpose.msra.mxu0 0.0
    %199 = vmatpush.xpose.msra.mxu0 0.0
    %200 = vmatpush.xpose.msra.mxu0 0.0
    %201 = vmatpush.xpose.msra.mxu0 0.0
    %202 = vmatpush.xpose.msra.mxu0 0.0
    %203 = vmatpush.xpose.msra.mxu0 0.0
    %204 = vmatpush.xpose.msra.mxu0 0.0
    %205 = vmatpush.xpose.msra.mxu0 0.0
    %206 = vmatpush.xpose.msra.mxu0 0.0
    %207 = vmatpush.xpose.msra.mxu0 0.0
    %v208 = vand.u32 %v83, 4294901760
    %v209 = vsub.f32 %v83, %v208
    %v210 = vand.u32 %v209, 4294901760
    %211 = vmatpush.xpose.msra.mxu0 %v210
    %v212 = vand.u32 %v80, 4294901760
    %v213 = vsub.f32 %v80, %v212
    %v214 = vand.u32 %v213, 4294901760
    %215 = vmatpush.xpose.msra.mxu0 %v214
    %v216 = vand.u32 %v77, 4294901760
    %217 = vmatmul.f32.gmra.mxu0 %v216
    %v218 = vpop.f32.mrf.mxu0
    %v219 = vadd.f32 %v192, %v218
    %220 = vdwg.mxu0
    %221 = vmatpush.xpose.msra.mxu0 0.0
    %222 = vmatpush.xpose.msra.mxu0 0.0
    %223 = vmatpush.xpose.msra.mxu0 0.0
    %224 = vmatpush.xpose.msra.mxu0 0.0
    %225 = vmatpush.xpose.msra.mxu0 0.0
    %226 = vmatpush.xpose.msra.mxu0 0.0
    %227 = vmatpush.xpose.msra.mxu0 0.0
    %228 = vmatpush.xpose.msra.mxu0 0.0
    %229 = vmatpush.xpose.msra.mxu0 0.0
    %230 = vmatpush.xpose.msra.mxu0 0.0
    %231 = vmatpush.xpose.msra.mxu0 0.0
    %232 = vmatpush.xpose.msra.mxu0 0.0
    %233 = vmatpush.xpose.msra.mxu0 0.0
    %234 = vmatpush.xpose.msra.mxu0 0.0
    %v235 = vand.u32 %v83, 4294901760
    %236 = vmatpush.xpose.msra.mxu0 %v235
    %v237 = vand.u32 %v80, 4294901760
    %238 = vmatpush.xpose.msra.mxu0 %v237
    %v239 = vand.u32 %v77, 4294901760
    %240 = vmatmul.f32.gmra.mxu0 %v239
    %v241 = vpop.f32.mrf.mxu0
    %v242 = vadd.f32 %v219, %v241
    %243 = vdwg.mxu0
    %v244 = vmul.f32 %v242, %v242
    %vm245 = vcmask 130048
    %v246 = vsel %vm245, %v244, 0.0
    %247 = vadd.xlane.f32.xlu0 %v246
    %v248 = vpop.xlane.xlu0 %247
    %v249 = vrsqrt.pop %v248
    %v250 = vmul.f32 %v249, %v248
    %v251 = vmul.f32 %v250, %v249
    %v252 = vmul.f32 0.5, %v251
    %v253 = vsub.f32 1.5, %v252
    %v254 = vmul.f32 %v249, %v253
    %vm255 = vweird.f32 %v248
    %vm256 = vweird.f32 %v249
    %vm257 = vmor %vm255, %vm256
    %v258 = vsel %vm257, %v249, %v254
    %v259 = vmul.f32 %v242, %v258
    %v260 = vmul.f32 %v259, %v259
    %261 = vst.msk [vmem:[#allocation7] sm:$0xff] %vm245, %v260
    // Predicated region
    $region18: #{tpu_custom_call.1} parent=1 // pred_check
      _
    $region19: #{tpu_custom_call.1} parent=1 // pred_check_branch
      %263 = sbr.rel (0) target = $region21
    $region20: #{tpu_custom_call.1} parent=1 // pred_region
      %265 = vsyncadd [#allocation4], 0
      %s267 = sshll.u32 [#allocation7], 4
      %s268 = int_to_ptr.vmem [resolvable:$true] %s267
      %s269 = sshll.u32 %s2, 4
      %s270 = int_to_ptr.hbm [resolvable:$true] %s269
      %272 = dma.vmem_to_hbm [thread:$0]  %s268, 128, %s270, [#allocation4]
    $region21: #{tpu_custom_call.1} parent=1 // pred_fallthru
      _
    // Predicated region
    $region22: #{tpu_custom_call.1} parent=1 // pred_check
      _
    $region23: #{tpu_custom_call.1} parent=1 // pred_check_branch
      %274 = sbr.rel (0) target = $region25
    $region24: #{tpu_custom_call.1} parent=1 // pred_region
      %276 = dma.done [#allocation4], 128
    $region25: #{tpu_custom_call.1} parent=1 // pred_fallthru
      _
    %277 = vsyncpa [#allocation3], 1
    %278 = vsyncpa [#allocation6], 1
    %279 = vsyncpa [#allocation4], 1

</llo_original>
